<compile_context>
chip_gen: v6e
topology: v6e:2x2x1
jax: 0.10.0
libtpu: 0.0.40
codegen_flags: <defaults>
</compile_context>

<pallas_src>
import math
import jax
import jax.numpy as jnp
from jax.experimental import pallas as pl
from jax.experimental.pallas import tpu as pltpu

_LANE = 128  # TPU lane width; feature dims padded to a multiple of this.


def _round_up(x, m):
    return (x + m - 1) // m * m


def mlp_kernel(x_ref, w1_ref, b1_ref, w2_ref, b2_ref, w3_ref, b3_ref, o_ref):
    # fc1 + ReLU
    h = jnp.dot(x_ref[...], w1_ref[...], preferred_element_type=jnp.float32)
    h = jnp.maximum(h + b1_ref[...], 0.0)
    # fc2 + ReLU
    h = jnp.dot(h, w2_ref[...], preferred_element_type=jnp.float32)
    h = jnp.maximum(h + b2_ref[...], 0.0)
    # fc3 (no activation)
    o = jnp.dot(h, w3_ref[...], preferred_element_type=jnp.float32) + b3_ref[...]
    o_ref[...] = o.astype(o_ref.dtype)


def feedforward_nn(x, params, *, batch_tile=256):
    """Run the 3-layer MLP. x: (B, input_dim) float32.

    batch_tile: rows per grid step. Keep it a multiple of 128 (MXU height);
    sweep 256-1024 for large batches. For v7x (2 TensorCores) pick batch_tile
    <= B/2 so the "parallel" grid axis has >= 2 steps to shard across cores.
    """
    assert batch_tile % 8 == 0, "batch_tile must be a multiple of 8 (sublanes)"
    w1, b1, w2, b2, w3, b3 = params
    B, in_dim = x.shape
    hid = w1.shape[1]
    out_dim = w3.shape[1]

    # Lane-dense padded sizes (exact in f32: padding with zeros adds zero terms).
    in_p = _round_up(in_dim, _LANE)
    hid_p = _round_up(hid, _LANE)
    out_p = _round_up(out_dim, _LANE)
    b_p = _round_up(B, batch_tile)

    f32 = jnp.float32
    xp = jnp.zeros((b_p, in_p), f32).at[:B, :in_dim].set(x.astype(f32))
    w1p = jnp.zeros((in_p, hid_p), f32).at[:in_dim, :hid].set(w1)
    b1p = jnp.zeros((1, hid_p), f32).at[:, :hid].set(b1)
    w2p = jnp.zeros((hid_p, hid_p), f32).at[:hid, :hid].set(w2)
    b2p = jnp.zeros((1, hid_p), f32).at[:, :hid].set(b2)
    w3p = jnp.zeros((hid_p, out_p), f32).at[:hid, :out_dim].set(w3)
    b3p = jnp.zeros((1, out_p), f32).at[:, :out_dim].set(b3)

    grid = (b_p // batch_tile,)

    # Weights/biases are tiny: replicate the full (padded) tensor to every step.
    rep2 = lambda shape: pl.BlockSpec(shape, lambda i: (0, 0))

    out_padded = pl.pallas_call(
        mlp_kernel,
        out_shape=jax.ShapeDtypeStruct((b_p, out_p), f32),
        grid_spec=pltpu.PrefetchScalarGridSpec(
            num_scalar_prefetch=0,
            grid=grid,
            in_specs=[
                pl.BlockSpec((batch_tile, in_p), lambda i: (i, 0)),  # x tile
                rep2((in_p, hid_p)),    # W1
                rep2((1, hid_p)),       # b1
                rep2((hid_p, hid_p)),   # W2
                rep2((1, hid_p)),       # b2
                rep2((hid_p, out_p)),   # W3
                rep2((1, out_p)),       # b3
            ],
            out_specs=pl.BlockSpec((batch_tile, out_p), lambda i: (i, 0)),
        ),
        compiler_params=pltpu.CompilerParams(
            dimension_semantics=("parallel",),  # batch tiles are independent
        ),
    )(xp, w1p, b1p, w2p, b2p, w3p, b3p)

    # Drop batch / output-lane padding.
    return out_padded[:B, :out_dim]


def init_params(key, input_dim, output_dim, hidden_dim=64):
    """Deterministic init mimicking torch.nn.Linear default U(-1/sqrt(fan_in), +)."""
    def linear(key, fan_in, fan_out):
        kw, kb = jax.random.split(key)
        bound = 1.0 / math.sqrt(fan_in)
        # stored already transposed: (fan_in, fan_out)
        w = jax.random.uniform(kw, (fan_in, fan_out), jnp.float32, -bound, bound)
        b = jax.random.uniform(kb, (1, fan_out), jnp.float32, -bound, bound)
        return w, b

    k1, k2, k3 = jax.random.split(key, 3)
    w1, b1 = linear(k1, input_dim, hidden_dim)
    w2, b2 = linear(k2, hidden_dim, hidden_dim)
    w3, b3 = linear(k3, hidden_dim, output_dim)   # fan_in is hidden_dim, explicitly
    return (w1, b1, w2, b2, w3, b3)


def reference(x, params):
    w1, b1, w2, b2, w3, b3 = params
    h = jnp.maximum(x @ w1 + b1, 0.0)
    h = jnp.maximum(h @ w2 + b2, 0.0)
    return h @ w3 + b3


if __name__ == "__main__":
    key = jax.random.PRNGKey(0)
    kx, kp = jax.random.split(key)

    batch, input_dim, hidden_dim, output_dim = 8, 16, 64, 4
    x = jax.random.normal(kx, (batch, input_dim), jnp.float32)
    params = init_params(kp, input_dim, output_dim, hidden_dim)

    out = feedforward_nn(x, params)           # batch padded to batch_tile inside
    out = jax.block_until_ready(out)

    ref = reference(x, params)
    assert out.shape == (batch, output_dim)
    assert jnp.allclose(out, ref, atol=1e-5, rtol=1e-5)

    print("KERNEL_OK")
</pallas_src>

<mosaic_0001>
module attributes {stable_mosaic.version = 11 : i64} {
  func.func @mlp_kernel(%arg0: i32, %arg1: memref<256x128xf32, #tpu.memory_space<vmem>>, %arg2: memref<128x128xf32, #tpu.memory_space<vmem>>, %arg3: memref<1x128xf32, #tpu.memory_space<vmem>>, %arg4: memref<128x128xf32, #tpu.memory_space<vmem>>, %arg5: memref<1x128xf32, #tpu.memory_space<vmem>>, %arg6: memref<128x128xf32, #tpu.memory_space<vmem>>, %arg7: memref<1x128xf32, #tpu.memory_space<vmem>>, %arg8: memref<256x128xf32, #tpu.memory_space<vmem>>) attributes {dimension_semantics = [#tpu.dimension_semantics<parallel>], iteration_bounds = array<i64: 1>, scalar_prefetch = 0 : i64, scratch_operands = 0 : i64, tpu.core_type = #tpu.core_type<tc>, window_params = [{transform_indices = @transform_0, window_bounds = array<i64: 256, 128>}, {pipeline_mode = #tpu.pipeline_mode<synchronous>, transform_indices = @transform_1, window_bounds = array<i64: 128, 128>}, {pipeline_mode = #tpu.pipeline_mode<synchronous>, transform_indices = @transform_2, window_bounds = array<i64: 1, 128>}, {pipeline_mode = #tpu.pipeline_mode<synchronous>, transform_indices = @transform_3, window_bounds = array<i64: 128, 128>}, {pipeline_mode = #tpu.pipeline_mode<synchronous>, transform_indices = @transform_4, window_bounds = array<i64: 1, 128>}, {pipeline_mode = #tpu.pipeline_mode<synchronous>, transform_indices = @transform_5, window_bounds = array<i64: 128, 128>}, {pipeline_mode = #tpu.pipeline_mode<synchronous>, transform_indices = @transform_6, window_bounds = array<i64: 1, 128>}, {transform_indices = @transform_7, window_bounds = array<i64: 256, 128>}]} {
    %c0 = arith.constant 0 : index
    %c0_0 = arith.constant 0 : index
    %0 = vector.load %arg1[%c0, %c0_0] : memref<256x128xf32, #tpu.memory_space<vmem>>, vector<256x128xf32>
    %c0_1 = arith.constant 0 : index
    %c0_2 = arith.constant 0 : index
    %1 = vector.load %arg2[%c0_1, %c0_2] : memref<128x128xf32, #tpu.memory_space<vmem>>, vector<128x128xf32>
    %cst = arith.constant dense<0.000000e+00> : vector<256x128xf32>
    %2 = tpu.matmul %0, %1, %cst {dimension_numbers = #tpu.dot_dimension_numbers<[1], [0], [0], [1], [0, 0, 1, 1], [], []>} : vector<256x128xf32>, vector<128x128xf32>, vector<256x128xf32> -> vector<256x128xf32>
    %c0_3 = arith.constant 0 : index
    %c0_4 = arith.constant 0 : index
    %3 = vector.load %arg3[%c0_3, %c0_4] : memref<1x128xf32, #tpu.memory_space<vmem>>, vector<1x128xf32>
    %4 = vector.broadcast %3 : vector<1x128xf32> to vector<256x128xf32>
    %5 = arith.addf %2, %4 : vector<256x128xf32>
    %cst_5 = arith.constant 0.000000e+00 : f32
    %6 = vector.broadcast %cst_5 : f32 to vector<256x128xf32>
    %7 = arith.maximumf %5, %6 : vector<256x128xf32>
    %c0_6 = arith.constant 0 : index
    %c0_7 = arith.constant 0 : index
    %8 = vector.load %arg4[%c0_6, %c0_7] : memref<128x128xf32, #tpu.memory_space<vmem>>, vector<128x128xf32>
    %cst_8 = arith.constant dense<0.000000e+00> : vector<256x128xf32>
    %9 = tpu.matmul %7, %8, %cst_8 {dimension_numbers = #tpu.dot_dimension_numbers<[1], [0], [0], [1], [0, 0, 1, 1], [], []>} : vector<256x128xf32>, vector<128x128xf32>, vector<256x128xf32> -> vector<256x128xf32>
    %c0_9 = arith.constant 0 : index
    %c0_10 = arith.constant 0 : index
    %10 = vector.load %arg5[%c0_9, %c0_10] : memref<1x128xf32, #tpu.memory_space<vmem>>, vector<1x128xf32>
    %11 = vector.broadcast %10 : vector<1x128xf32> to vector<256x128xf32>
    %12 = arith.addf %9, %11 : vector<256x128xf32>
    %cst_11 = arith.constant 0.000000e+00 : f32
    %13 = vector.broadcast %cst_11 : f32 to vector<256x128xf32>
    %14 = arith.maximumf %12, %13 : vector<256x128xf32>
    %c0_12 = arith.constant 0 : index
    %c0_13 = arith.constant 0 : index
    %15 = vector.load %arg6[%c0_12, %c0_13] : memref<128x128xf32, #tpu.memory_space<vmem>>, vector<128x128xf32>
    %cst_14 = arith.constant dense<0.000000e+00> : vector<256x128xf32>
    %16 = tpu.matmul %14, %15, %cst_14 {dimension_numbers = #tpu.dot_dimension_numbers<[1], [0], [0], [1], [0, 0, 1, 1], [], []>} : vector<256x128xf32>, vector<128x128xf32>, vector<256x128xf32> -> vector<256x128xf32>
    %c0_15 = arith.constant 0 : index
    %c0_16 = arith.constant 0 : index
    %17 = vector.load %arg7[%c0_15, %c0_16] : memref<1x128xf32, #tpu.memory_space<vmem>>, vector<1x128xf32>
    %18 = vector.broadcast %17 : vector<1x128xf32> to vector<256x128xf32>
    %19 = arith.addf %16, %18 : vector<256x128xf32>
    %c0_17 = arith.constant 0 : index
    %c0_18 = arith.constant 0 : index
    %20 = vector.load %arg8[%c0_17, %c0_18] : memref<256x128xf32, #tpu.memory_space<vmem>>, vector<256x128xf32>
    tpu.vector_store %arg8[%c0_17, %c0_18], %19 {strides = array<i32>} : memref<256x128xf32, #tpu.memory_space<vmem>>, vector<256x128xf32>,
    return
  }
  func.func @transform_0(%arg0: i32) -> (i32, i32) {
    %c0_i32 = arith.constant 0 : i32
    %c0_i32_0 = arith.constant 0 : i32
    return %arg0, %c0_i32 : i32, i32
  }
  func.func @transform_1(%arg0: i32) -> (i32, i32) {
    %c0_i32 = arith.constant 0 : i32
    %c0_i32_0 = arith.constant 0 : i32
    %c0_i32_1 = arith.constant 0 : i32
    return %c0_i32, %c0_i32_0 : i32, i32
  }
  func.func @transform_2(%arg0: i32) -> (i32, i32) {
    %c0_i32 = arith.constant 0 : i32
    %c0_i32_0 = arith.constant 0 : i32
    %c0_i32_1 = arith.constant 0 : i32
    return %c0_i32, %c0_i32_0 : i32, i32
  }
  func.func @transform_3(%arg0: i32) -> (i32, i32) {
    %c0_i32 = arith.constant 0 : i32
    %c0_i32_0 = arith.constant 0 : i32
    %c0_i32_1 = arith.constant 0 : i32
    return %c0_i32, %c0_i32_0 : i32, i32
  }
  func.func @transform_4(%arg0: i32) -> (i32, i32) {
    %c0_i32 = arith.constant 0 : i32
    %c0_i32_0 = arith.constant 0 : i32
    %c0_i32_1 = arith.constant 0 : i32
    return %c0_i32, %c0_i32_0 : i32, i32
  }
  func.func @transform_5(%arg0: i32) -> (i32, i32) {
    %c0_i32 = arith.constant 0 : i32
    %c0_i32_0 = arith.constant 0 : i32
    %c0_i32_1 = arith.constant 0 : i32
    return %c0_i32, %c0_i32_0 : i32, i32
  }
  func.func @transform_6(%arg0: i32) -> (i32, i32) {
    %c0_i32 = arith.constant 0 : i32
    %c0_i32_0 = arith.constant 0 : i32
    %c0_i32_1 = arith.constant 0 : i32
    return %c0_i32, %c0_i32_0 : i32, i32
  }
  func.func @transform_7(%arg0: i32) -> (i32, i32) {
    %c0_i32 = arith.constant 0 : i32
    %c0_i32_0 = arith.constant 0 : i32
    return %arg0, %c0_i32 : i32, i32
  }
}

</mosaic_0001>

<llo_original>
// kernel: tpu_custom_call.1
$region0: #{tpu_custom_call.1}
  #allocation0 [shape = 'u32[]', space=smem, size = 0x4, offset = 0x4, fixed_abs, tag = 'smem constant byte address 0x4 - core index']
  #allocation1 [shape = 'u32[144,128]{1,0:T(1,128)}', space=vmem, size = 0x12000, scoped, tag = 'internal scratch']
  %s0 = inlined_call_operand.hbm [shape: f32[256,128], index: 0, kind: input, shape index: {}]
  %s1 = inlined_call_operand.hbm [shape: f32[128,128], index: 1, kind: input, shape index: {}]
  %s2 = inlined_call_operand.vmem [shape: f32[1,128], index: 2, kind: input, shape index: {}]
  %s3 = inlined_call_operand.hbm [shape: f32[128,128], index: 3, kind: input, shape index: {}]
  %s4 = inlined_call_operand.vmem [shape: f32[1,128], index: 4, kind: input, shape index: {}]
  %s5 = inlined_call_operand.hbm [shape: f32[128,128], index: 5, kind: input, shape index: {}]
  %s6 = inlined_call_operand.vmem [shape: f32[1,128], index: 6, kind: input, shape index: {}]
  %s7 = inlined_call_operand.hbm [shape: f32[256,128], index: 7, kind: output, shape index: {}]
  %s8 = sld [smem:[#allocation0]]
  $region54: #{tpu_custom_call.1} parent=0
    _
  %s10 = ssub.s32 1, %s8
  %s11 = scalar_select 0, %s10, %s8
  $region1: #{tpu_custom_call.1} parent=0
    #allocation2 [shape = 'u8[131072]{0}', space=vmem, size = 0x20000, scoped, tag = 'input window, operand 0, single buffered']
    #allocation3 [shape = 's32[1]{0}', space=sflag, size = 0x4, scoped, tag = 'scoped memory for tpu_custom_call.1']
    #allocation4 [shape = 's32[1]{0}', space=sflag, size = 0x4, scoped, tag = 'scoped memory for tpu_custom_call.1']
    #allocation5 [shape = 'u8[65536]{0}', space=vmem, size = 0x10000, scoped, tag = 'input window, operand 1, single buffered']
    #allocation6 [shape = 's32[1]{0}', space=sflag, size = 0x4, scoped, tag = 'scoped memory for tpu_custom_call.1']
    #allocation7 [shape = 'u8[65536]{0}', space=vmem, size = 0x10000, scoped, tag = 'input window, operand 3, single buffered']
    #allocation8 [shape = 'u8[65536]{0}', space=vmem, size = 0x10000, scoped, tag = 'input window, operand 5, single buffered']
    #allocation9 [shape = 's32[1]{0}', space=sflag, size = 0x4, scoped, tag = 'scoped memory for tpu_custom_call.1']
    #allocation10 [shape = 'u8[131072]{0}', space=vmem, size = 0x20000, scoped, tag = 'output window, operand 0, single buffered']
    %12 = vsyncpa [#allocation3], 0
    %13 = vsyncpa [#allocation6], 0
    %14 = vsyncpa [#allocation9], 0
    %15 = vsyncpa [#allocation4], 0
    // Predicated region
    $region2: #{tpu_custom_call.1} parent=1 // pred_check
      _
    $region3: #{tpu_custom_call.1} parent=1 // pred_check_branch
      %17 = sbr.rel (0) target = $region5
    $region4: #{tpu_custom_call.1} parent=1 // pred_region
      %s19 = ssub.s32 4096, 4096
      %20 = vsyncadd [#allocation3], %s19
      %s21 = sshll.u32 [#allocation2], 4
      %s22 = int_to_ptr.vmem [resolvable:$true] %s21
      %27 = dma.hbm_to_vmem [thread:$0]  %s0, 4096, %s22, [#allocation3], 128, 128, 8
    $region5: #{tpu_custom_call.1} parent=1 // pred_fallthru
      _
    // Predicated region
    $region6: #{tpu_custom_call.1} parent=1 // pred_check
      _
    $region7: #{tpu_custom_call.1} parent=1 // pred_check_branch
      %29 = sbr.rel (0) target = $region9
    $region8: #{tpu_custom_call.1} parent=1 // pred_region
      %s31 = ssub.s32 2048, 2048
      %32 = vsyncadd [#allocation6], %s31
      %s33 = sshll.u32 [#allocation5], 4
      %s34 = int_to_ptr.vmem [resolvable:$true] %s33
      %39 = dma.hbm_to_vmem [thread:$0]  %s1, 2048, %s34, [#allocation6], 128, 128, 8
    $region9: #{tpu_custom_call.1} parent=1 // pred_fallthru
      _
    // Predicated region
    $region10: #{tpu_custom_call.1} parent=1 // pred_check
      _
    $region11: #{tpu_custom_call.1} parent=1 // pred_check_branch
      %41 = sbr.rel (0) target = $region13
    $region12: #{tpu_custom_call.1} parent=1 // pred_region
      _
    $region13: #{tpu_custom_call.1} parent=1 // pred_fallthru
      _
    // Predicated region
    $region14: #{tpu_custom_call.1} parent=1 // pred_check
      _
    $region15: #{tpu_custom_call.1} parent=1 // pred_check_branch
      %43 = sbr.rel (0) target = $region17
    $region16: #{tpu_custom_call.1} parent=1 // pred_region
      %s45 = ssub.s32 2048, 2048
      %46 = vsyncadd [#allocation6], %s45
      %s47 = sshll.u32 [#allocation7], 4
      %s48 = int_to_ptr.vmem [resolvable:$true] %s47
      %53 = dma.hbm_to_vmem [thread:$0]  %s3, 2048, %s48, [#allocation6], 128, 128, 8
    $region17: #{tpu_custom_call.1} parent=1 // pred_fallthru
      _
    // Predicated region
    $region18: #{tpu_custom_call.1} parent=1 // pred_check
      _
    $region19: #{tpu_custom_call.1} parent=1 // pred_check_branch
      %55 = sbr.rel (0) target = $region21
    $region20: #{tpu_custom_call.1} parent=1 // pred_region
      _
    $region21: #{tpu_custom_call.1} parent=1 // pred_fallthru
      _
    // Predicated region
    $region22: #{tpu_custom_call.1} parent=1 // pred_check
      _
    $region23: #{tpu_custom_call.1} parent=1 // pred_check_branch
      %57 = sbr.rel (0) target = $region25
    $region24: #{tpu_custom_call.1} parent=1 // pred_region
      %s59 = ssub.s32 2048, 2048
      %60 = vsyncadd [#allocation9], %s59
      %s61 = sshll.u32 [#allocation8], 4
      %s62 = int_to_ptr.vmem [resolvable:$true] %s61
      %67 = dma.hbm_to_vmem [thread:$0]  %s5, 2048, %s62, [#allocation9], 128, 128, 8
    $region25: #{tpu_custom_call.1} parent=1 // pred_fallthru
      _
    // Predicated region
    $region26: #{tpu_custom_call.1} parent=1 // pred_check
      _
    $region27: #{tpu_custom_call.1} parent=1 // pred_check_branch
      %69 = sbr.rel (0) target = $region29
    $region28: #{tpu_custom_call.1} parent=1 // pred_region
      _
    $region29: #{tpu_custom_call.1} parent=1 // pred_fallthru
      _
    // Predicated region
    $region30: #{tpu_custom_call.1} parent=1 // pred_check
      _
    $region31: #{tpu_custom_call.1} parent=1 // pred_check_branch
      %71 = sbr.rel (0) target = $region33
    $region32: #{tpu_custom_call.1} parent=1 // pred_region
      %72 = dma.done [#allocation3], 4096
    $region33: #{tpu_custom_call.1} parent=1 // pred_fallthru
      _
    // Predicated region
    $region34: #{tpu_custom_call.1} parent=1 // pred_check
      _
    $region35: #{tpu_custom_call.1} parent=1 // pred_check_branch
      %74 = sbr.rel (0) target = $region37
    $region36: #{tpu_custom_call.1} parent=1 // pred_region
      %75 = dma.done [#allocation6], 2048
    $region37: #{tpu_custom_call.1} parent=1 // pred_fallthru
      _
    // Predicated region
    $region38: #{tpu_custom_call.1} parent=1 // pred_check
      _
    $region39: #{tpu_custom_call.1} parent=1 // pred_check_branch
      %77 = sbr.rel (0) target = $region41
    $region40: #{tpu_custom_call.1} parent=1 // pred_region
      %78 = dma.done [#allocation6], 2048
    $region41: #{tpu_custom_call.1} parent=1 // pred_fallthru
      _
    // Predicated region
    $region42: #{tpu_custom_call.1} parent=1 // pred_check
      _
    $region43: #{tpu_custom_call.1} parent=1 // pred_check_branch
      %80 = sbr.rel (0) target = $region45
    $region44: #{tpu_custom_call.1} parent=1 // pred_region
      %81 = dma.done [#allocation9], 2048
    $region45: #{tpu_custom_call.1} parent=1 // pred_fallthru
      _
    %v82 = vld [vmem:[#allocation2] sm:$0xff]
    %v83 = vld [vmem:[#allocation2 + $0x8] sm:$0xff]
    %v84 = vld [vmem:[#allocation2 + $0x10] sm:$0xff]
    %v85 = vld [vmem:[#allocation2 + $0x18] sm:$0xff]
    %v86 = vld [vmem:[#allocation2 + $0x20] sm:$0xff]
    %v87 = vld [vmem:[#allocation2 + $0x28] sm:$0xff]
    %v88 = vld [vmem:[#allocation2 + $0x30] sm:$0xff]
    %v89 = vld [vmem:[#allocation2 + $0x38] sm:$0xff]
    %v90 = vld [vmem:[#allocation2 + $0x40] sm:$0xff]
    %v91 = vld [vmem:[#allocation2 + $0x48] sm:$0xff]
    %v92 = vld [vmem:[#allocation2 + $0x50] sm:$0xff]
    %v93 = vld [vmem:[#allocation2 + $0x58] sm:$0xff]
    %v94 = vld [vmem:[#allocation2 + $0x60] sm:$0xff]
    %v95 = vld [vmem:[#allocation2 + $0x68] sm:$0xff]
    %v96 = vld [vmem:[#allocation2 + $0x70] sm:$0xff]
    %v97 = vld [vmem:[#allocation2 + $0x78] sm:$0xff]
    %v98 = vld [vmem:[#allocation2 + $0x80] sm:$0xff]
    %v99 = vld [vmem:[#allocation2 + $0x88] sm:$0xff]
    %v100 = vld [vmem:[#allocation2 + $0x90] sm:$0xff]
    %v101 = vld [vmem:[#allocation2 + $0x98] sm:$0xff]
    %v102 = vld [vmem:[#allocation2 + $0xa0] sm:$0xff]
    %v103 = vld [vmem:[#allocation2 + $0xa8] sm:$0xff]
    %v104 = vld [vmem:[#allocation2 + $0xb0] sm:$0xff]
    %v105 = vld [vmem:[#allocation2 + $0xb8] sm:$0xff]
    %v106 = vld [vmem:[#allocation2 + $0xc0] sm:$0xff]
    %v107 = vld [vmem:[#allocation2 + $0xc8] sm:$0xff]
    %v108 = vld [vmem:[#allocation2 + $0xd0] sm:$0xff]
    %v109 = vld [vmem:[#allocation2 + $0xd8] sm:$0xff]
    %v110 = vld [vmem:[#allocation2 + $0xe0] sm:$0xff]
    %v111 = vld [vmem:[#allocation2 + $0xe8] sm:$0xff]
    %v112 = vld [vmem:[#allocation2 + $0xf0] sm:$0xff]
    %v113 = vld [vmem:[#allocation2 + $0xf8] sm:$0xff]
    %v114 = vld [vmem:[#allocation5] sm:$0xff]
    %v115 = vld [vmem:[#allocation5 + $0x8] sm:$0xff]
    %v116 = vld [vmem:[#allocation5 + $0x10] sm:$0xff]
    %v117 = vld [vmem:[#allocation5 + $0x18] sm:$0xff]
    %v118 = vld [vmem:[#allocation5 + $0x20] sm:$0xff]
    %v119 = vld [vmem:[#allocation5 + $0x28] sm:$0xff]
    %v120 = vld [vmem:[#allocation5 + $0x30] sm:$0xff]
    %v121 = vld [vmem:[#allocation5 + $0x38] sm:$0xff]
    %v122 = vld [vmem:[#allocation5 + $0x40] sm:$0xff]
    %v123 = vld [vmem:[#allocation5 + $0x48] sm:$0xff]
    %v124 = vld [vmem:[#allocation5 + $0x50] sm:$0xff]
    %v125 = vld [vmem:[#allocation5 + $0x58] sm:$0xff]
    %v126 = vld [vmem:[#allocation5 + $0x60] sm:$0xff]
    %v127 = vld [vmem:[#allocation5 + $0x68] sm:$0xff]
    %v128 = vld [vmem:[#allocation5 + $0x70] sm:$0xff]
    %v129 = vld [vmem:[#allocation5 + $0x78] sm:$0xff]
    %v130 = vld [vmem:[%s2] sm:$0x1]
    %v132 = vlaneseq
    %v133 = vshrl.u32 %v132, 7
    %v134 = vsub.s32 0, %v133
    %v135 = vrot.slane %v130, %v134
    %137 = vmatprep.subr.mxu0 0.0
    %138 = vmatpush1.msra.mxu0 %v129
    %139 = vmatprep.subr.mxu0 0.0
    %140 = vmatpush1.msra.mxu0 %v128
    %141 = vmatprep.subr.mxu0 0.0
    %142 = vmatpush1.msra.mxu0 %v127
    %143 = vmatprep.subr.mxu0 0.0
    %144 = vmatpush1.msra.mxu0 %v126
    %145 = vmatprep.subr.mxu0 0.0
    %146 = vmatpush1.msra.mxu0 %v125
    %147 = vmatprep.subr.mxu0 0.0
    %148 = vmatpush1.msra.mxu0 %v124
    %149 = vmatprep.subr.mxu0 0.0
    %150 = vmatpush1.msra.mxu0 %v123
    %151 = vmatprep.subr.mxu0 0.0
    %152 = vmatpush1.msra.mxu0 %v122
    %153 = vmatprep.subr.mxu0 0.0
    %154 = vmatpush1.msra.mxu0 %v121
    %155 = vmatprep.subr.mxu0 0.0
    %156 = vmatpush1.msra.mxu0 %v120
    %157 = vmatprep.subr.mxu0 0.0
    %158 = vmatpush1.msra.mxu0 %v119
    %159 = vmatprep.subr.mxu0 0.0
    %160 = vmatpush1.msra.mxu0 %v118
    %161 = vmatprep.subr.mxu0 0.0
    %162 = vmatpush1.msra.mxu0 %v117
    %163 = vmatprep.subr.mxu0 0.0
    %164 = vmatpush1.msra.mxu0 %v116
    %165 = vmatprep.subr.mxu0 0.0
    %166 = vmatpush1.msra.mxu0 %v115
    %167 = vmatprep.subr.mxu0 0.0
    %168 = vmatpush1.msra.mxu0 %v114
    %169 = vmatprep.subr.mxu0 0.0
    %170 = vmatpush2.msra.mxu0 0.0
    %171 = vmatprep.subr.mxu0 0.0
    %172 = vmatpush2.msra.mxu0 0.0
    %173 = vmatprep.subr.mxu0 0.0
    %174 = vmatpush2.msra.mxu0 0.0
    %175 = vmatprep.subr.mxu0 0.0
    %176 = vmatpush2.msra.mxu0 0.0
    %177 = vmatprep.subr.mxu0 0.0
    %178 = vmatpush2.msra.mxu0 0.0
    %179 = vmatprep.subr.mxu0 0.0
    %180 = vmatpush2.msra.mxu0 0.0
    %181 = vmatprep.subr.mxu0 0.0
    %182 = vmatpush2.msra.mxu0 0.0
    %183 = vmatprep.subr.mxu0 0.0
    %184 = vmatpush2.msra.mxu0 0.0
    %185 = vmatprep.subr.mxu0 0.0
    %186 = vmatpush2.msra.mxu0 0.0
    %187 = vmatprep.subr.mxu0 0.0
    %188 = vmatpush2.msra.mxu0 0.0
    %189 = vmatprep.subr.mxu0 0.0
    %190 = vmatpush2.msra.mxu0 0.0
    %191 = vmatprep.subr.mxu0 0.0
    %192 = vmatpush2.msra.mxu0 0.0
    %193 = vmatprep.subr.mxu0 0.0
    %194 = vmatpush2.msra.mxu0 0.0
    %195 = vmatprep.subr.mxu0 0.0
    %196 = vmatpush2.msra.mxu0 0.0
    %197 = vmatprep.subr.mxu0 0.0
    %198 = vmatpush2.msra.mxu0 0.0
    %199 = vmatprep.subr.mxu0 0.0
    %200 = vmatpush2.msra.mxu0 0.0
    %201 = vmatprep.mubr.f32.mxu0 0.0
    %202 = vmatmul.mubr.f32.gmra.mxu0 %v82
    %v203 = vpop.f32.mrf.mxu0
    %v204 = vadd.f32 %v135, %v203
    %v205 = vpop.f32.mrf.mxu0
    %206 = vmatprep.mubr.f32.mxu0 0.0
    %207 = vmatmul.mubr.f32.gmra.mxu0 %v83
    %v208 = vpop.f32.mrf.mxu0
    %v209 = vadd.f32 %v135, %v208
    %v210 = vpop.f32.mrf.mxu0
    %211 = vmatprep.mubr.f32.mxu0 0.0
    %212 = vmatmul.mubr.f32.gmra.mxu0 %v84
    %v213 = vpop.f32.mrf.mxu0
    %v214 = vadd.f32 %v135, %v213
    %v215 = vpop.f32.mrf.mxu0
    %216 = vmatprep.mubr.f32.mxu0 0.0
    %217 = vmatmul.mubr.f32.gmra.mxu0 %v85
    %v218 = vpop.f32.mrf.mxu0
    %v219 = vadd.f32 %v135, %v218
    %v220 = vpop.f32.mrf.mxu0
    %221 = vmatprep.mubr.f32.mxu0 0.0
    %222 = vmatmul.mubr.f32.gmra.mxu0 %v86
    %v223 = vpop.f32.mrf.mxu0
    %v224 = vadd.f32 %v135, %v223
    %v225 = vpop.f32.mrf.mxu0
    %226 = vmatprep.mubr.f32.mxu0 0.0
    %227 = vmatmul.mubr.f32.gmra.mxu0 %v87
    %v228 = vpop.f32.mrf.mxu0
    %v229 = vadd.f32 %v135, %v228
    %v230 = vpop.f32.mrf.mxu0
    %231 = vmatprep.mubr.f32.mxu0 0.0
    %232 = vmatmul.mubr.f32.gmra.mxu0 %v88
    %v233 = vpop.f32.mrf.mxu0
    %v234 = vadd.f32 %v135, %v233
    %v235 = vpop.f32.mrf.mxu0
    %236 = vmatprep.mubr.f32.mxu0 0.0
    %237 = vmatmul.mubr.f32.gmra.mxu0 %v89
    %v238 = vpop.f32.mrf.mxu0
    %v239 = vadd.f32 %v135, %v238
    %v240 = vpop.f32.mrf.mxu0
    %241 = vmatprep.mubr.f32.mxu0 0.0
    %242 = vmatmul.mubr.f32.gmra.mxu0 %v90
    %v243 = vpop.f32.mrf.mxu0
    %v244 = vadd.f32 %v135, %v243
    %v245 = vpop.f32.mrf.mxu0
    %246 = vmatprep.mubr.f32.mxu0 0.0
    %247 = vmatmul.mubr.f32.gmra.mxu0 %v91
    %v248 = vpop.f32.mrf.mxu0
    %v249 = vadd.f32 %v135, %v248
    %v250 = vpop.f32.mrf.mxu0
    %251 = vmatprep.mubr.f32.mxu0 0.0
    %252 = vmatmul.mubr.f32.gmra.mxu0 %v92
    %v253 = vpop.f32.mrf.mxu0
    %v254 = vadd.f32 %v135, %v253
    %v255 = vpop.f32.mrf.mxu0
    %256 = vmatprep.mubr.f32.mxu0 0.0
    %257 = vmatmul.mubr.f32.gmra.mxu0 %v93
    %v258 = vpop.f32.mrf.mxu0
    %v259 = vadd.f32 %v135, %v258
    %v260 = vpop.f32.mrf.mxu0
    %261 = vmatprep.mubr.f32.mxu0 0.0
    %262 = vmatmul.mubr.f32.gmra.mxu0 %v94
    %v263 = vpop.f32.mrf.mxu0
    %v264 = vadd.f32 %v135, %v263
    %v265 = vpop.f32.mrf.mxu0
    %266 = vmatprep.mubr.f32.mxu0 0.0
    %267 = vmatmul.mubr.f32.gmra.mxu0 %v95
    %v268 = vpop.f32.mrf.mxu0
    %v269 = vadd.f32 %v135, %v268
    %v270 = vpop.f32.mrf.mxu0
    %271 = vmatprep.mubr.f32.mxu0 0.0
    %272 = vmatmul.mubr.f32.gmra.mxu0 %v96
    %v273 = vpop.f32.mrf.mxu0
    %v274 = vadd.f32 %v135, %v273
    %v275 = vpop.f32.mrf.mxu0
    %276 = vmatprep.mubr.f32.mxu0 0.0
    %277 = vmatmul.mubr.f32.gmra.mxu0 %v97
    %v278 = vpop.f32.mrf.mxu0
    %v279 = vadd.f32 %v135, %v278
    %v280 = vpop.f32.mrf.mxu0
    %281 = vmatprep.mubr.f32.mxu0 0.0
    %282 = vmatmul.mubr.f32.gmra.mxu0 %v98
    %v283 = vpop.f32.mrf.mxu0
    %v284 = vadd.f32 %v135, %v283
    %v285 = vpop.f32.mrf.mxu0
    %286 = vmatprep.mubr.f32.mxu0 0.0
    %287 = vmatmul.mubr.f32.gmra.mxu0 %v99
    %v288 = vpop.f32.mrf.mxu0
    %v289 = vadd.f32 %v135, %v288
    %v290 = vpop.f32.mrf.mxu0
    %291 = vmatprep.mubr.f32.mxu0 0.0
    %292 = vmatmul.mubr.f32.gmra.mxu0 %v100
    %v293 = vpop.f32.mrf.mxu0
    %v294 = vadd.f32 %v135, %v293
    %v295 = vpop.f32.mrf.mxu0
    %296 = vmatprep.mubr.f32.mxu0 0.0
    %297 = vmatmul.mubr.f32.gmra.mxu0 %v101
    %v298 = vpop.f32.mrf.mxu0
    %v299 = vadd.f32 %v135, %v298
    %v300 = vpop.f32.mrf.mxu0
    %301 = vmatprep.mubr.f32.mxu0 0.0
    %302 = vmatmul.mubr.f32.gmra.mxu0 %v102
    %v303 = vpop.f32.mrf.mxu0
    %v304 = vadd.f32 %v135, %v303
    %v305 = vpop.f32.mrf.mxu0
    %306 = vmatprep.mubr.f32.mxu0 0.0
    %307 = vmatmul.mubr.f32.gmra.mxu0 %v103
    %v308 = vpop.f32.mrf.mxu0
    %v309 = vadd.f32 %v135, %v308
    %v310 = vpop.f32.mrf.mxu0
    %311 = vmatprep.mubr.f32.mxu0 0.0
    %312 = vmatmul.mubr.f32.gmra.mxu0 %v104
    %v313 = vpop.f32.mrf.mxu0
    %v314 = vadd.f32 %v135, %v313
    %v315 = vpop.f32.mrf.mxu0
    %316 = vmatprep.mubr.f32.mxu0 0.0
    %317 = vmatmul.mubr.f32.gmra.mxu0 %v105
    %v318 = vpop.f32.mrf.mxu0
    %v319 = vadd.f32 %v135, %v318
    %v320 = vpop.f32.mrf.mxu0
    %321 = vmatprep.mubr.f32.mxu0 0.0
    %322 = vmatmul.mubr.f32.gmra.mxu0 %v106
    %v323 = vpop.f32.mrf.mxu0
    %v324 = vadd.f32 %v135, %v323
    %v325 = vpop.f32.mrf.mxu0
    %326 = vmatprep.mubr.f32.mxu0 0.0
    %327 = vmatmul.mubr.f32.gmra.mxu0 %v107
    %v328 = vpop.f32.mrf.mxu0
    %v329 = vadd.f32 %v135, %v328
    %v330 = vpop.f32.mrf.mxu0
    %331 = vmatprep.mubr.f32.mxu0 0.0
    %332 = vmatmul.mubr.f32.gmra.mxu0 %v108
    %v333 = vpop.f32.mrf.mxu0
    %v334 = vadd.f32 %v135, %v333
    %v335 = vpop.f32.mrf.mxu0
    %336 = vmatprep.mubr.f32.mxu0 0.0
    %337 = vmatmul.mubr.f32.gmra.mxu0 %v109
    %v338 = vpop.f32.mrf.mxu0
    %v339 = vadd.f32 %v135, %v338
    %v340 = vpop.f32.mrf.mxu0
    %341 = vmatprep.mubr.f32.mxu0 0.0
    %342 = vmatmul.mubr.f32.gmra.mxu0 %v110
    %v343 = vpop.f32.mrf.mxu0
    %v344 = vadd.f32 %v135, %v343
    %v345 = vpop.f32.mrf.mxu0
    %346 = vmatprep.mubr.f32.mxu0 0.0
    %347 = vmatmul.mubr.f32.gmra.mxu0 %v111
    %v348 = vpop.f32.mrf.mxu0
    %v349 = vadd.f32 %v135, %v348
    %v350 = vpop.f32.mrf.mxu0
    %351 = vmatprep.mubr.f32.mxu0 0.0
    %352 = vmatmul.mubr.f32.gmra.mxu0 %v112
    %v353 = vpop.f32.mrf.mxu0
    %v354 = vadd.f32 %v135, %v353
    %v355 = vpop.f32.mrf.mxu0
    %356 = vmatprep.mubr.f32.mxu0 0.0
    %357 = vmatmul.mubr.f32.gmra.mxu0 %v113
    %v358 = vpop.f32.mrf.mxu0
    %v359 = vadd.f32 %v135, %v358
    %v360 = vpop.f32.mrf.mxu0
    %361 = vdwg.mxu0
    %v362 = vmax.f32 %v204, 0.0
    %v363 = vmax.f32 %v209, 0.0
    %v364 = vmax.f32 %v214, 0.0
    %v365 = vmax.f32 %v219, 0.0
    %v366 = vmax.f32 %v224, 0.0
    %v367 = vmax.f32 %v229, 0.0
    %v368 = vmax.f32 %v234, 0.0
    %v369 = vmax.f32 %v239, 0.0
    %v370 = vmax.f32 %v244, 0.0
    %v371 = vmax.f32 %v249, 0.0
    %v372 = vmax.f32 %v254, 0.0
    %v373 = vmax.f32 %v259, 0.0
    %v374 = vmax.f32 %v264, 0.0
    %v375 = vmax.f32 %v269, 0.0
    %v376 = vmax.f32 %v274, 0.0
    %v377 = vmax.f32 %v279, 0.0
    %v378 = vmax.f32 %v284, 0.0
    %v379 = vmax.f32 %v289, 0.0
    %v380 = vmax.f32 %v294, 0.0
    %v381 = vmax.f32 %v299, 0.0
    %v382 = vmax.f32 %v304, 0.0
    %v383 = vmax.f32 %v309, 0.0
    %v384 = vmax.f32 %v314, 0.0
    %v385 = vmax.f32 %v319, 0.0
    %v386 = vmax.f32 %v324, 0.0
    %v387 = vmax.f32 %v329, 0.0
    %v388 = vmax.f32 %v334, 0.0
    %v389 = vmax.f32 %v339, 0.0
    %v390 = vmax.f32 %v344, 0.0
    %v391 = vmax.f32 %v349, 0.0
    %v392 = vmax.f32 %v354, 0.0
    %v393 = vmax.f32 %v359, 0.0
    %v394 = vld [vmem:[#allocation7] sm:$0xff]
    %v395 = vld [vmem:[#allocation7 + $0x8] sm:$0xff]
    %v396 = vld [vmem:[#allocation7 + $0x10] sm:$0xff]
    %v397 = vld [vmem:[#allocation7 + $0x18] sm:$0xff]
    %v398 = vld [vmem:[#allocation7 + $0x20] sm:$0xff]
    %v399 = vld [vmem:[#allocation7 + $0x28] sm:$0xff]
    %v400 = vld [vmem:[#allocation7 + $0x30] sm:$0xff]
    %v401 = vld [vmem:[#allocation7 + $0x38] sm:$0xff]
    %v402 = vld [vmem:[#allocation7 + $0x40] sm:$0xff]
    %v403 = vld [vmem:[#allocation7 + $0x48] sm:$0xff]
    %v404 = vld [vmem:[#allocation7 + $0x50] sm:$0xff]
    %v405 = vld [vmem:[#allocation7 + $0x58] sm:$0xff]
    %v406 = vld [vmem:[#allocation7 + $0x60] sm:$0xff]
    %v407 = vld [vmem:[#allocation7 + $0x68] sm:$0xff]
    %v408 = vld [vmem:[#allocation7 + $0x70] sm:$0xff]
    %v409 = vld [vmem:[#allocation7 + $0x78] sm:$0xff]
    %v410 = vld [vmem:[%s4] sm:$0x1]
    %v412 = vlaneseq
    %v413 = vshrl.u32 %v412, 7
    %v414 = vsub.s32 0, %v413
    %v415 = vrot.slane %v410, %v414
    %417 = vmatprep.subr.mxu0 0.0
    %418 = vmatpush1.msra.mxu0 %v409
    %419 = vmatprep.subr.mxu0 0.0
    %420 = vmatpush1.msra.mxu0 %v408
    %421 = vmatprep.subr.mxu0 0.0
    %422 = vmatpush1.msra.mxu0 %v407
    %423 = vmatprep.subr.mxu0 0.0
    %424 = vmatpush1.msra.mxu0 %v406
    %425 = vmatprep.subr.mxu0 0.0
    %426 = vmatpush1.msra.mxu0 %v405
    %427 = vmatprep.subr.mxu0 0.0
    %428 = vmatpush1.msra.mxu0 %v404
    %429 = vmatprep.subr.mxu0 0.0
    %430 = vmatpush1.msra.mxu0 %v403
    %431 = vmatprep.subr.mxu0 0.0
    %432 = vmatpush1.msra.mxu0 %v402
    %433 = vmatprep.subr.mxu0 0.0
    %434 = vmatpush1.msra.mxu0 %v401
    %435 = vmatprep.subr.mxu0 0.0
    %436 = vmatpush1.msra.mxu0 %v400
    %437 = vmatprep.subr.mxu0 0.0
    %438 = vmatpush1.msra.mxu0 %v399
    %439 = vmatprep.subr.mxu0 0.0
    %440 = vmatpush1.msra.mxu0 %v398
    %441 = vmatprep.subr.mxu0 0.0
    %442 = vmatpush1.msra.mxu0 %v397
    %443 = vmatprep.subr.mxu0 0.0
    %444 = vmatpush1.msra.mxu0 %v396
    %445 = vmatprep.subr.mxu0 0.0
    %446 = vmatpush1.msra.mxu0 %v395
    %447 = vmatprep.subr.mxu0 0.0
    %448 = vmatpush1.msra.mxu0 %v394
    %449 = vmatprep.subr.mxu0 0.0
    %450 = vmatpush2.msra.mxu0 0.0
    %451 = vmatprep.subr.mxu0 0.0
    %452 = vmatpush2.msra.mxu0 0.0
    %453 = vmatprep.subr.mxu0 0.0
    %454 = vmatpush2.msra.mxu0 0.0
    %455 = vmatprep.subr.mxu0 0.0
    %456 = vmatpush2.msra.mxu0 0.0
    %457 = vmatprep.subr.mxu0 0.0
    %458 = vmatpush2.msra.mxu0 0.0
    %459 = vmatprep.subr.mxu0 0.0
    %460 = vmatpush2.msra.mxu0 0.0
    %461 = vmatprep.subr.mxu0 0.0
    %462 = vmatpush2.msra.mxu0 0.0
    %463 = vmatprep.subr.mxu0 0.0
    %464 = vmatpush2.msra.mxu0 0.0
    %465 = vmatprep.subr.mxu0 0.0
    %466 = vmatpush2.msra.mxu0 0.0
    %467 = vmatprep.subr.mxu0 0.0
    %468 = vmatpush2.msra.mxu0 0.0
    %469 = vmatprep.subr.mxu0 0.0
    %470 = vmatpush2.msra.mxu0 0.0
    %471 = vmatprep.subr.mxu0 0.0
    %472 = vmatpush2.msra.mxu0 0.0
    %473 = vmatprep.subr.mxu0 0.0
    %474 = vmatpush2.msra.mxu0 0.0
    %475 = vmatprep.subr.mxu0 0.0
    %476 = vmatpush2.msra.mxu0 0.0
    %477 = vmatprep.subr.mxu0 0.0
    %478 = vmatpush2.msra.mxu0 0.0
    %479 = vmatprep.subr.mxu0 0.0
    %480 = vmatpush2.msra.mxu0 0.0
    %481 = vmatprep.mubr.f32.mxu0 0.0
    %482 = vmatmul.mubr.f32.gmra.mxu0 %v362
    %v483 = vpop.f32.mrf.mxu0
    %v484 = vadd.f32 %v415, %v483
    %v485 = vpop.f32.mrf.mxu0
    %486 = vmatprep.mubr.f32.mxu0 0.0
    %487 = vmatmul.mubr.f32.gmra.mxu0 %v363
    %v488 = vpop.f32.mrf.mxu0
    %v489 = vadd.f32 %v415, %v488
    %v490 = vpop.f32.mrf.mxu0
    %491 = vmatprep.mubr.f32.mxu0 0.0
    %492 = vmatmul.mubr.f32.gmra.mxu0 %v364
    %v493 = vpop.f32.mrf.mxu0
    %v494 = vadd.f32 %v415, %v493
    %v495 = vpop.f32.mrf.mxu0
    %496 = vmatprep.mubr.f32.mxu0 0.0
    %497 = vmatmul.mubr.f32.gmra.mxu0 %v365
    %v498 = vpop.f32.mrf.mxu0
    %v499 = vadd.f32 %v415, %v498
    %v500 = vpop.f32.mrf.mxu0
    %501 = vmatprep.mubr.f32.mxu0 0.0
    %502 = vmatmul.mubr.f32.gmra.mxu0 %v366
    %v503 = vpop.f32.mrf.mxu0
    %v504 = vadd.f32 %v415, %v503
    %v505 = vpop.f32.mrf.mxu0
    %506 = vmatprep.mubr.f32.mxu0 0.0
    %507 = vmatmul.mubr.f32.gmra.mxu0 %v367
    %v508 = vpop.f32.mrf.mxu0
    %v509 = vadd.f32 %v415, %v508
    %v510 = vpop.f32.mrf.mxu0
    %511 = vmatprep.mubr.f32.mxu0 0.0
    %512 = vmatmul.mubr.f32.gmra.mxu0 %v368
    %v513 = vpop.f32.mrf.mxu0
    %v514 = vadd.f32 %v415, %v513
    %v515 = vpop.f32.mrf.mxu0
    %516 = vmatprep.mubr.f32.mxu0 0.0
    %517 = vmatmul.mubr.f32.gmra.mxu0 %v369
    %v518 = vpop.f32.mrf.mxu0
    %v519 = vadd.f32 %v415, %v518
    %v520 = vpop.f32.mrf.mxu0
    %521 = vmatprep.mubr.f32.mxu0 0.0
    %522 = vmatmul.mubr.f32.gmra.mxu0 %v370
    %v523 = vpop.f32.mrf.mxu0
    %v524 = vadd.f32 %v415, %v523
    %v525 = vpop.f32.mrf.mxu0
    %526 = vmatprep.mubr.f32.mxu0 0.0
    %527 = vmatmul.mubr.f32.gmra.mxu0 %v371
    %v528 = vpop.f32.mrf.mxu0
    %v529 = vadd.f32 %v415, %v528
    %v530 = vpop.f32.mrf.mxu0
    %531 = vmatprep.mubr.f32.mxu0 0.0
    %532 = vmatmul.mubr.f32.gmra.mxu0 %v372
    %v533 = vpop.f32.mrf.mxu0
    %v534 = vadd.f32 %v415, %v533
    %v535 = vpop.f32.mrf.mxu0
    %536 = vmatprep.mubr.f32.mxu0 0.0
    %537 = vmatmul.mubr.f32.gmra.mxu0 %v373
    %v538 = vpop.f32.mrf.mxu0
    %v539 = vadd.f32 %v415, %v538
    %v540 = vpop.f32.mrf.mxu0
    %541 = vmatprep.mubr.f32.mxu0 0.0
    %542 = vmatmul.mubr.f32.gmra.mxu0 %v374
    %v543 = vpop.f32.mrf.mxu0
    %v544 = vadd.f32 %v415, %v543
    %v545 = vpop.f32.mrf.mxu0
    %546 = vmatprep.mubr.f32.mxu0 0.0
    %547 = vmatmul.mubr.f32.gmra.mxu0 %v375
    %v548 = vpop.f32.mrf.mxu0
    %v549 = vadd.f32 %v415, %v548
    %v550 = vpop.f32.mrf.mxu0
    %551 = vmatprep.mubr.f32.mxu0 0.0
    %552 = vmatmul.mubr.f32.gmra.mxu0 %v376
    %v553 = vpop.f32.mrf.mxu0
    %v554 = vadd.f32 %v415, %v553
    %v555 = vpop.f32.mrf.mxu0
    %556 = vmatprep.mubr.f32.mxu0 0.0
    %557 = vmatmul.mubr.f32.gmra.mxu0 %v377
    %v558 = vpop.f32.mrf.mxu0
    %v559 = vadd.f32 %v415, %v558
    %v560 = vpop.f32.mrf.mxu0
    %561 = vmatprep.mubr.f32.mxu0 0.0
    %562 = vmatmul.mubr.f32.gmra.mxu0 %v378
    %v563 = vpop.f32.mrf.mxu0
    %v564 = vadd.f32 %v415, %v563
    %v565 = vpop.f32.mrf.mxu0
    %566 = vmatprep.mubr.f32.mxu0 0.0
    %567 = vmatmul.mubr.f32.gmra.mxu0 %v379
    %v568 = vpop.f32.mrf.mxu0
    %v569 = vadd.f32 %v415, %v568
    %v570 = vpop.f32.mrf.mxu0
    %571 = vmatprep.mubr.f32.mxu0 0.0
    %572 = vmatmul.mubr.f32.gmra.mxu0 %v380
    %v573 = vpop.f32.mrf.mxu0
    %v574 = vadd.f32 %v415, %v573
    %v575 = vpop.f32.mrf.mxu0
    %576 = vmatprep.mubr.f32.mxu0 0.0
    %577 = vmatmul.mubr.f32.gmra.mxu0 %v381
    %v578 = vpop.f32.mrf.mxu0
    %v579 = vadd.f32 %v415, %v578
    %v580 = vpop.f32.mrf.mxu0
    %581 = vmatprep.mubr.f32.mxu0 0.0
    %582 = vmatmul.mubr.f32.gmra.mxu0 %v382
    %v583 = vpop.f32.mrf.mxu0
    %v584 = vadd.f32 %v415, %v583
    %v585 = vpop.f32.mrf.mxu0
    %586 = vmatprep.mubr.f32.mxu0 0.0
    %587 = vmatmul.mubr.f32.gmra.mxu0 %v383
    %v588 = vpop.f32.mrf.mxu0
    %v589 = vadd.f32 %v415, %v588
    %v590 = vpop.f32.mrf.mxu0
    %591 = vmatprep.mubr.f32.mxu0 0.0
    %592 = vmatmul.mubr.f32.gmra.mxu0 %v384
    %v593 = vpop.f32.mrf.mxu0
    %v594 = vadd.f32 %v415, %v593
    %v595 = vpop.f32.mrf.mxu0
    %596 = vmatprep.mubr.f32.mxu0 0.0
    %597 = vmatmul.mubr.f32.gmra.mxu0 %v385
    %v598 = vpop.f32.mrf.mxu0
    %v599 = vadd.f32 %v415, %v598
    %v600 = vpop.f32.mrf.mxu0
    %601 = vmatprep.mubr.f32.mxu0 0.0
    %602 = vmatmul.mubr.f32.gmra.mxu0 %v386
    %v603 = vpop.f32.mrf.mxu0
    %v604 = vadd.f32 %v415, %v603
    %v605 = vpop.f32.mrf.mxu0
    %606 = vmatprep.mubr.f32.mxu0 0.0
    %607 = vmatmul.mubr.f32.gmra.mxu0 %v387
    %v608 = vpop.f32.mrf.mxu0
    %v609 = vadd.f32 %v415, %v608
    %v610 = vpop.f32.mrf.mxu0
    %611 = vmatprep.mubr.f32.mxu0 0.0
    %612 = vmatmul.mubr.f32.gmra.mxu0 %v388
    %v613 = vpop.f32.mrf.mxu0
    %v614 = vadd.f32 %v415, %v613
    %v615 = vpop.f32.mrf.mxu0
    %616 = vmatprep.mubr.f32.mxu0 0.0
    %617 = vmatmul.mubr.f32.gmra.mxu0 %v389
    %v618 = vpop.f32.mrf.mxu0
    %v619 = vadd.f32 %v415, %v618
    %v620 = vpop.f32.mrf.mxu0
    %621 = vmatprep.mubr.f32.mxu0 0.0
    %622 = vmatmul.mubr.f32.gmra.mxu0 %v390
    %v623 = vpop.f32.mrf.mxu0
    %v624 = vadd.f32 %v415, %v623
    %v625 = vpop.f32.mrf.mxu0
    %626 = vmatprep.mubr.f32.mxu0 0.0
    %627 = vmatmul.mubr.f32.gmra.mxu0 %v391
    %v628 = vpop.f32.mrf.mxu0
    %v629 = vadd.f32 %v415, %v628
    %v630 = vpop.f32.mrf.mxu0
    %631 = vmatprep.mubr.f32.mxu0 0.0
    %632 = vmatmul.mubr.f32.gmra.mxu0 %v392
    %v633 = vpop.f32.mrf.mxu0
    %v634 = vadd.f32 %v415, %v633
    %v635 = vpop.f32.mrf.mxu0
    %636 = vmatprep.mubr.f32.mxu0 0.0
    %637 = vmatmul.mubr.f32.gmra.mxu0 %v393
    %v638 = vpop.f32.mrf.mxu0
    %v639 = vadd.f32 %v415, %v638
    %v640 = vpop.f32.mrf.mxu0
    %641 = vdwg.mxu0
    %v642 = vmax.f32 %v484, 0.0
    %v643 = vmax.f32 %v489, 0.0
    %v644 = vmax.f32 %v494, 0.0
    %v645 = vmax.f32 %v499, 0.0
    %v646 = vmax.f32 %v504, 0.0
    %v647 = vmax.f32 %v509, 0.0
    %v648 = vmax.f32 %v514, 0.0
    %v649 = vmax.f32 %v519, 0.0
    %v650 = vmax.f32 %v524, 0.0
    %v651 = vmax.f32 %v529, 0.0
    %v652 = vmax.f32 %v534, 0.0
    %v653 = vmax.f32 %v539, 0.0
    %v654 = vmax.f32 %v544, 0.0
    %v655 = vmax.f32 %v549, 0.0
    %v656 = vmax.f32 %v554, 0.0
    %v657 = vmax.f32 %v559, 0.0
    %v658 = vmax.f32 %v564, 0.0
    %v659 = vmax.f32 %v569, 0.0
    %v660 = vmax.f32 %v574, 0.0
    %v661 = vmax.f32 %v579, 0.0
    %v662 = vmax.f32 %v584, 0.0
    %v663 = vmax.f32 %v589, 0.0
    %v664 = vmax.f32 %v594, 0.0
    %v665 = vmax.f32 %v599, 0.0
    %v666 = vmax.f32 %v604, 0.0
    %v667 = vmax.f32 %v609, 0.0
    %v668 = vmax.f32 %v614, 0.0
    %v669 = vmax.f32 %v619, 0.0
    %v670 = vmax.f32 %v624, 0.0
    %v671 = vmax.f32 %v629, 0.0
    %v672 = vmax.f32 %v634, 0.0
    %v673 = vmax.f32 %v639, 0.0
    %v674 = vld [vmem:[#allocation8] sm:$0xff]
    %v675 = vld [vmem:[#allocation8 + $0x8] sm:$0xff]
    %v676 = vld [vmem:[#allocation8 + $0x10] sm:$0xff]
    %v677 = vld [vmem:[#allocation8 + $0x18] sm:$0xff]
    %v678 = vld [vmem:[#allocation8 + $0x20] sm:$0xff]
    %v679 = vld [vmem:[#allocation8 + $0x28] sm:$0xff]
    %v680 = vld [vmem:[#allocation8 + $0x30] sm:$0xff]
    %v681 = vld [vmem:[#allocation8 + $0x38] sm:$0xff]
    %v682 = vld [vmem:[#allocation8 + $0x40] sm:$0xff]
    %v683 = vld [vmem:[#allocation8 + $0x48] sm:$0xff]
    %v684 = vld [vmem:[#allocation8 + $0x50] sm:$0xff]
    %v685 = vld [vmem:[#allocation8 + $0x58] sm:$0xff]
    %v686 = vld [vmem:[#allocation8 + $0x60] sm:$0xff]
    %v687 = vld [vmem:[#allocation8 + $0x68] sm:$0xff]
    %v688 = vld [vmem:[#allocation8 + $0x70] sm:$0xff]
    %v689 = vld [vmem:[#allocation8 + $0x78] sm:$0xff]
    %v690 = vld [vmem:[%s6] sm:$0x1]
    %v692 = vlaneseq
    %v693 = vshrl.u32 %v692, 7
    %v694 = vsub.s32 0, %v693
    %v695 = vrot.slane %v690, %v694
    %697 = vmatprep.subr.mxu0 0.0
    %698 = vmatpush1.msra.mxu0 %v689
    %699 = vmatprep.subr.mxu0 0.0
    %700 = vmatpush1.msra.mxu0 %v688
    %701 = vmatprep.subr.mxu0 0.0
    %702 = vmatpush1.msra.mxu0 %v687
    %703 = vmatprep.subr.mxu0 0.0
    %704 = vmatpush1.msra.mxu0 %v686
    %705 = vmatprep.subr.mxu0 0.0
    %706 = vmatpush1.msra.mxu0 %v685
    %707 = vmatprep.subr.mxu0 0.0
    %708 = vmatpush1.msra.mxu0 %v684
    %709 = vmatprep.subr.mxu0 0.0
    %710 = vmatpush1.msra.mxu0 %v683
    %711 = vmatprep.subr.mxu0 0.0
    %712 = vmatpush1.msra.mxu0 %v682
    %713 = vmatprep.subr.mxu0 0.0
    %714 = vmatpush1.msra.mxu0 %v681
    %715 = vmatprep.subr.mxu0 0.0
    %716 = vmatpush1.msra.mxu0 %v680
    %717 = vmatprep.subr.mxu0 0.0
    %718 = vmatpush1.msra.mxu0 %v679
    %719 = vmatprep.subr.mxu0 0.0
    %720 = vmatpush1.msra.mxu0 %v678
    %721 = vmatprep.subr.mxu0 0.0
    %722 = vmatpush1.msra.mxu0 %v677
    %723 = vmatprep.subr.mxu0 0.0
    %724 = vmatpush1.msra.mxu0 %v676
    %725 = vmatprep.subr.mxu0 0.0
    %726 = vmatpush1.msra.mxu0 %v675
    %727 = vmatprep.subr.mxu0 0.0
    %728 = vmatpush1.msra.mxu0 %v674
    %729 = vmatprep.subr.mxu0 0.0
    %730 = vmatpush2.msra.mxu0 0.0
    %731 = vmatprep.subr.mxu0 0.0
    %732 = vmatpush2.msra.mxu0 0.0
    %733 = vmatprep.subr.mxu0 0.0
    %734 = vmatpush2.msra.mxu0 0.0
    %735 = vmatprep.subr.mxu0 0.0
    %736 = vmatpush2.msra.mxu0 0.0
    %737 = vmatprep.subr.mxu0 0.0
    %738 = vmatpush2.msra.mxu0 0.0
    %739 = vmatprep.subr.mxu0 0.0
    %740 = vmatpush2.msra.mxu0 0.0
    %741 = vmatprep.subr.mxu0 0.0
    %742 = vmatpush2.msra.mxu0 0.0
    %743 = vmatprep.subr.mxu0 0.0
    %744 = vmatpush2.msra.mxu0 0.0
    %745 = vmatprep.subr.mxu0 0.0
    %746 = vmatpush2.msra.mxu0 0.0
    %747 = vmatprep.subr.mxu0 0.0
    %748 = vmatpush2.msra.mxu0 0.0
    %749 = vmatprep.subr.mxu0 0.0
    %750 = vmatpush2.msra.mxu0 0.0
    %751 = vmatprep.subr.mxu0 0.0
    %752 = vmatpush2.msra.mxu0 0.0
    %753 = vmatprep.subr.mxu0 0.0
    %754 = vmatpush2.msra.mxu0 0.0
    %755 = vmatprep.subr.mxu0 0.0
    %756 = vmatpush2.msra.mxu0 0.0
    %757 = vmatprep.subr.mxu0 0.0
    %758 = vmatpush2.msra.mxu0 0.0
    %759 = vmatprep.subr.mxu0 0.0
    %760 = vmatpush2.msra.mxu0 0.0
    %761 = vmatprep.mubr.f32.mxu0 0.0
    %762 = vmatmul.mubr.f32.gmra.mxu0 %v642
    %v763 = vpop.f32.mrf.mxu0
    %v764 = vadd.f32 %v695, %v763
    %v765 = vpop.f32.mrf.mxu0
    %766 = vmatprep.mubr.f32.mxu0 0.0
    %767 = vmatmul.mubr.f32.gmra.mxu0 %v643
    %v768 = vpop.f32.mrf.mxu0
    %v769 = vadd.f32 %v695, %v768
    %v770 = vpop.f32.mrf.mxu0
    %771 = vmatprep.mubr.f32.mxu0 0.0
    %772 = vmatmul.mubr.f32.gmra.mxu0 %v644
    %v773 = vpop.f32.mrf.mxu0
    %v774 = vadd.f32 %v695, %v773
    %v775 = vpop.f32.mrf.mxu0
    %776 = vmatprep.mubr.f32.mxu0 0.0
    %777 = vmatmul.mubr.f32.gmra.mxu0 %v645
    %v778 = vpop.f32.mrf.mxu0
    %v779 = vadd.f32 %v695, %v778
    %v780 = vpop.f32.mrf.mxu0
    %781 = vmatprep.mubr.f32.mxu0 0.0
    %782 = vmatmul.mubr.f32.gmra.mxu0 %v646
    %v783 = vpop.f32.mrf.mxu0
    %v784 = vadd.f32 %v695, %v783
    %v785 = vpop.f32.mrf.mxu0
    %786 = vmatprep.mubr.f32.mxu0 0.0
    %787 = vmatmul.mubr.f32.gmra.mxu0 %v647
    %v788 = vpop.f32.mrf.mxu0
    %v789 = vadd.f32 %v695, %v788
    %v790 = vpop.f32.mrf.mxu0
    %791 = vmatprep.mubr.f32.mxu0 0.0
    %792 = vmatmul.mubr.f32.gmra.mxu0 %v648
    %v793 = vpop.f32.mrf.mxu0
    %v794 = vadd.f32 %v695, %v793
    %v795 = vpop.f32.mrf.mxu0
    %796 = vmatprep.mubr.f32.mxu0 0.0
    %797 = vmatmul.mubr.f32.gmra.mxu0 %v649
    %v798 = vpop.f32.mrf.mxu0
    %v799 = vadd.f32 %v695, %v798
    %v800 = vpop.f32.mrf.mxu0
    %801 = vmatprep.mubr.f32.mxu0 0.0
    %802 = vmatmul.mubr.f32.gmra.mxu0 %v650
    %v803 = vpop.f32.mrf.mxu0
    %v804 = vadd.f32 %v695, %v803
    %v805 = vpop.f32.mrf.mxu0
    %806 = vmatprep.mubr.f32.mxu0 0.0
    %807 = vmatmul.mubr.f32.gmra.mxu0 %v651
    %v808 = vpop.f32.mrf.mxu0
    %v809 = vadd.f32 %v695, %v808
    %v810 = vpop.f32.mrf.mxu0
    %811 = vmatprep.mubr.f32.mxu0 0.0
    %812 = vmatmul.mubr.f32.gmra.mxu0 %v652
    %v813 = vpop.f32.mrf.mxu0
    %v814 = vadd.f32 %v695, %v813
    %v815 = vpop.f32.mrf.mxu0
    %816 = vmatprep.mubr.f32.mxu0 0.0
    %817 = vmatmul.mubr.f32.gmra.mxu0 %v653
    %v818 = vpop.f32.mrf.mxu0
    %v819 = vadd.f32 %v695, %v818
    %v820 = vpop.f32.mrf.mxu0
    %821 = vmatprep.mubr.f32.mxu0 0.0
    %822 = vmatmul.mubr.f32.gmra.mxu0 %v654
    %v823 = vpop.f32.mrf.mxu0
    %v824 = vadd.f32 %v695, %v823
    %v825 = vpop.f32.mrf.mxu0
    %826 = vmatprep.mubr.f32.mxu0 0.0
    %827 = vmatmul.mubr.f32.gmra.mxu0 %v655
    %v828 = vpop.f32.mrf.mxu0
    %v829 = vadd.f32 %v695, %v828
    %v830 = vpop.f32.mrf.mxu0
    %831 = vmatprep.mubr.f32.mxu0 0.0
    %832 = vmatmul.mubr.f32.gmra.mxu0 %v656
    %v833 = vpop.f32.mrf.mxu0
    %v834 = vadd.f32 %v695, %v833
    %v835 = vpop.f32.mrf.mxu0
    %836 = vmatprep.mubr.f32.mxu0 0.0
    %837 = vmatmul.mubr.f32.gmra.mxu0 %v657
    %v838 = vpop.f32.mrf.mxu0
    %v839 = vadd.f32 %v695, %v838
    %v840 = vpop.f32.mrf.mxu0
    %841 = vmatprep.mubr.f32.mxu0 0.0
    %842 = vmatmul.mubr.f32.gmra.mxu0 %v658
    %v843 = vpop.f32.mrf.mxu0
    %v844 = vadd.f32 %v695, %v843
    %v845 = vpop.f32.mrf.mxu0
    %846 = vmatprep.mubr.f32.mxu0 0.0
    %847 = vmatmul.mubr.f32.gmra.mxu0 %v659
    %v848 = vpop.f32.mrf.mxu0
    %v849 = vadd.f32 %v695, %v848
    %v850 = vpop.f32.mrf.mxu0
    %851 = vmatprep.mubr.f32.mxu0 0.0
    %852 = vmatmul.mubr.f32.gmra.mxu0 %v660
    %v853 = vpop.f32.mrf.mxu0
    %v854 = vadd.f32 %v695, %v853
    %v855 = vpop.f32.mrf.mxu0
    %856 = vmatprep.mubr.f32.mxu0 0.0
    %857 = vmatmul.mubr.f32.gmra.mxu0 %v661
    %v858 = vpop.f32.mrf.mxu0
    %v859 = vadd.f32 %v695, %v858
    %v860 = vpop.f32.mrf.mxu0
    %861 = vmatprep.mubr.f32.mxu0 0.0
    %862 = vmatmul.mubr.f32.gmra.mxu0 %v662
    %v863 = vpop.f32.mrf.mxu0
    %v864 = vadd.f32 %v695, %v863
    %v865 = vpop.f32.mrf.mxu0
    %866 = vmatprep.mubr.f32.mxu0 0.0
    %867 = vmatmul.mubr.f32.gmra.mxu0 %v663
    %v868 = vpop.f32.mrf.mxu0
    %v869 = vadd.f32 %v695, %v868
    %v870 = vpop.f32.mrf.mxu0
    %871 = vmatprep.mubr.f32.mxu0 0.0
    %872 = vmatmul.mubr.f32.gmra.mxu0 %v664
    %v873 = vpop.f32.mrf.mxu0
    %v874 = vadd.f32 %v695, %v873
    %v875 = vpop.f32.mrf.mxu0
    %876 = vmatprep.mubr.f32.mxu0 0.0
    %877 = vmatmul.mubr.f32.gmra.mxu0 %v665
    %v878 = vpop.f32.mrf.mxu0
    %v879 = vadd.f32 %v695, %v878
    %v880 = vpop.f32.mrf.mxu0
    %881 = vmatprep.mubr.f32.mxu0 0.0
    %882 = vmatmul.mubr.f32.gmra.mxu0 %v666
    %v883 = vpop.f32.mrf.mxu0
    %v884 = vadd.f32 %v695, %v883
    %v885 = vpop.f32.mrf.mxu0
    %886 = vmatprep.mubr.f32.mxu0 0.0
    %887 = vmatmul.mubr.f32.gmra.mxu0 %v667
    %v888 = vpop.f32.mrf.mxu0
    %v889 = vadd.f32 %v695, %v888
    %v890 = vpop.f32.mrf.mxu0
    %891 = vmatprep.mubr.f32.mxu0 0.0
    %892 = vmatmul.mubr.f32.gmra.mxu0 %v668
    %v893 = vpop.f32.mrf.mxu0
    %v894 = vadd.f32 %v695, %v893
    %v895 = vpop.f32.mrf.mxu0
    %896 = vmatprep.mubr.f32.mxu0 0.0
    %897 = vmatmul.mubr.f32.gmra.mxu0 %v669
    %v898 = vpop.f32.mrf.mxu0
    %v899 = vadd.f32 %v695, %v898
    %v900 = vpop.f32.mrf.mxu0
    %901 = vmatprep.mubr.f32.mxu0 0.0
    %902 = vmatmul.mubr.f32.gmra.mxu0 %v670
    %v903 = vpop.f32.mrf.mxu0
    %v904 = vadd.f32 %v695, %v903
    %v905 = vpop.f32.mrf.mxu0
    %906 = vmatprep.mubr.f32.mxu0 0.0
    %907 = vmatmul.mubr.f32.gmra.mxu0 %v671
    %v908 = vpop.f32.mrf.mxu0
    %v909 = vadd.f32 %v695, %v908
    %v910 = vpop.f32.mrf.mxu0
    %911 = vmatprep.mubr.f32.mxu0 0.0
    %912 = vmatmul.mubr.f32.gmra.mxu0 %v672
    %v913 = vpop.f32.mrf.mxu0
    %v914 = vadd.f32 %v695, %v913
    %v915 = vpop.f32.mrf.mxu0
    %916 = vmatprep.mubr.f32.mxu0 0.0
    %917 = vmatmul.mubr.f32.gmra.mxu0 %v673
    %v918 = vpop.f32.mrf.mxu0
    %v919 = vadd.f32 %v695, %v918
    %v920 = vpop.f32.mrf.mxu0
    %921 = vdwg.mxu0
    %922 = vst [vmem:[#allocation10] sm:$0xff] %v764
    %923 = vst [vmem:[#allocation10 + $0x8] sm:$0xff] %v769
    %924 = vst [vmem:[#allocation10 + $0x10] sm:$0xff] %v774
    %925 = vst [vmem:[#allocation10 + $0x18] sm:$0xff] %v779
    %926 = vst [vmem:[#allocation10 + $0x20] sm:$0xff] %v784
    %927 = vst [vmem:[#allocation10 + $0x28] sm:$0xff] %v789
    %928 = vst [vmem:[#allocation10 + $0x30] sm:$0xff] %v794
    %929 = vst [vmem:[#allocation10 + $0x38] sm:$0xff] %v799
    %930 = vst [vmem:[#allocation10 + $0x40] sm:$0xff] %v804
    %931 = vst [vmem:[#allocation10 + $0x48] sm:$0xff] %v809
    %932 = vst [vmem:[#allocation10 + $0x50] sm:$0xff] %v814
    %933 = vst [vmem:[#allocation10 + $0x58] sm:$0xff] %v819
    %934 = vst [vmem:[#allocation10 + $0x60] sm:$0xff] %v824
    %935 = vst [vmem:[#allocation10 + $0x68] sm:$0xff] %v829
    %936 = vst [vmem:[#allocation10 + $0x70] sm:$0xff] %v834
    %937 = vst [vmem:[#allocation10 + $0x78] sm:$0xff] %v839
    %938 = vst [vmem:[#allocation10 + $0x80] sm:$0xff] %v844
    %939 = vst [vmem:[#allocation10 + $0x88] sm:$0xff] %v849
    %940 = vst [vmem:[#allocation10 + $0x90] sm:$0xff] %v854
    %941 = vst [vmem:[#allocation10 + $0x98] sm:$0xff] %v859
    %942 = vst [vmem:[#allocation10 + $0xa0] sm:$0xff] %v864
    %943 = vst [vmem:[#allocation10 + $0xa8] sm:$0xff] %v869
    %944 = vst [vmem:[#allocation10 + $0xb0] sm:$0xff] %v874
    %945 = vst [vmem:[#allocation10 + $0xb8] sm:$0xff] %v879
    %946 = vst [vmem:[#allocation10 + $0xc0] sm:$0xff] %v884
    %947 = vst [vmem:[#allocation10 + $0xc8] sm:$0xff] %v889
    %948 = vst [vmem:[#allocation10 + $0xd0] sm:$0xff] %v894
    %949 = vst [vmem:[#allocation10 + $0xd8] sm:$0xff] %v899
    %950 = vst [vmem:[#allocation10 + $0xe0] sm:$0xff] %v904
    %951 = vst [vmem:[#allocation10 + $0xe8] sm:$0xff] %v909
    %952 = vst [vmem:[#allocation10 + $0xf0] sm:$0xff] %v914
    %953 = vst [vmem:[#allocation10 + $0xf8] sm:$0xff] %v919
    // Predicated region
    $region46: #{tpu_custom_call.1} parent=1 // pred_check
      _
    $region47: #{tpu_custom_call.1} parent=1 // pred_check_branch
      %955 = sbr.rel (0) target = $region49
    $region48: #{tpu_custom_call.1} parent=1 // pred_region
      %s957 = ssub.s32 4096, 4096
      %958 = vsyncadd [#allocation4], %s957
      %s959 = sshll.u32 [#allocation10], 4
      %s960 = int_to_ptr.vmem [resolvable:$true] %s959
      %965 = dma.vmem_to_hbm [thread:$0]  %s960, 4096, %s7, [#allocation4], 128, 128, 8
    $region49: #{tpu_custom_call.1} parent=1 // pred_fallthru
      _
    // Predicated region
    $region50: #{tpu_custom_call.1} parent=1 // pred_check
      _
    $region51: #{tpu_custom_call.1} parent=1 // pred_check_branch
      %967 = sbr.rel (0) target = $region53
    $region52: #{tpu_custom_call.1} parent=1 // pred_region
      %968 = dma.done [#allocation4], 4096
    $region53: #{tpu_custom_call.1} parent=1 // pred_fallthru
      _
    %969 = vsyncpa [#allocation3], 1
    %970 = vsyncpa [#allocation6], 1
    %971 = vsyncpa [#allocation9], 1
    %972 = vsyncpa [#allocation4], 1

</llo_original>
